<compile_context>
chip_gen: v6e
topology: v6e:2x2x1
jax: 0.10.0
libtpu: 0.0.40
codegen_flags: <defaults>
</compile_context>

<pallas_src>
import functools
import math

import jax
import jax.numpy as jnp
from jax.experimental import pallas as pl
from jax.experimental.pallas import tpu as pltpu

_EPS = 1e-5            # F.normalize eps
_EPS2 = _EPS * _EPS


# --------------------------------------------------------------------------------------
# Kernel
# --------------------------------------------------------------------------------------
def _nbce_kernel(x_ref, wt_ref, b_ref, invx_ref, label_ref, out_ref,
                 *, m, s, mask_cols, c_actual):
    """One (class-split, B-tile, C-tile) step of the normalized margin-BCE loss."""
    g = pl.program_id(0)         # class-split (megacore) index
    c_idx = pl.program_id(2)     # C-tile index within this split
    n_c = pl.num_programs(2)
    tc = wt_ref.shape[1]

    @pl.when(c_idx == 0)
    def _init():
        out_ref[...] = jnp.zeros_like(out_ref)

    wt = wt_ref[...]                                   # (D, tc), compute dtype
    # Per-class inverse L2 norms from the already-resident weight tile.  The sublane
    # reduce lands the result directly in (1, tc) orientation (no relayout), and
    # rsqrt(max(ss, eps^2)) == 1 / max(||w||, eps), matching F.normalize(eps=1e-5).
    w32 = wt.astype(jnp.float32)
    inv_w = jax.lax.rsqrt(
        jnp.maximum(jnp.sum(w32 * w32, axis=0, keepdims=True), _EPS2))   # (1, tc)

    # (tb, D) @ (D, tc) K-major matmul with f32 accumulation on the MXU.
    raw = jnp.dot(x_ref[...], wt, preferred_element_type=jnp.float32)    # (tb, tc)
    cos = raw * invx_ref[...] * inv_w                                    # (tb, tc) f32

    bias = b_ref[...]                                                    # (1, tc) f32
    labels = label_ref[...]                                              # (tb, 1) i32
    col_start = (g * n_c + c_idx) * tc
    col_ids = col_start + jax.lax.broadcasted_iota(jnp.int32, cos.shape, 1)
    one_hot = col_ids == labels                        # == scatter_(1, label, 1)

    # Fused margin-BCE.  With n = s*cos - bias and p = n - s*m:
    #   p_loss = log(1+exp(-clip(p,-s,s))) = log(1+exp(clip(s*m - n, -s, s)))
    #   n_loss = log(1+exp( clip(n,-s,s)))
    # so a single exp/log pass over the tile suffices.
    logit_n = s * cos - bias
    z = jnp.clip(jnp.where(one_hot, (s * m) - logit_n, logit_n), -s, s)
    loss = jnp.log(1.0 + jnp.exp(z))
    if mask_cols:
        # Small-s fallback: explicitly zero padded classes.
        loss = jnp.where(col_ids < c_actual, loss, 0.0)
    # (When mask_cols is False the wrapper padded the bias with 3*s, so padded classes
    #  hit clip -> -s -> log(1 + exp(-s)) == 0.0 exactly in f32: no masking needed.)

    # Fold the (tb, tc) tile to a (tb, 128) lane-dense slab with vreg-aligned lane-chunk
    # adds (pure VALU, no XLU) and accumulate directly in the resident output block.
    partial = loss[:, :128]
    for j in range(1, tc // 128):
        partial = partial + loss[:, j * 128:(j + 1) * 128]
    out_ref[...] += partial


# --------------------------------------------------------------------------------------
# Tile sizing / VMEM accounting
# --------------------------------------------------------------------------------------
def _round_up(v, k):
    return (v + k - 1) // k * k


def _vmem_capacity():
    try:
        return int(pltpu.get_tpu_info().vmem_capacity_bytes)   # 64 MiB v7x, 128 MiB v5e/v6e
    except Exception:
        return 64 << 20


def _kernel_vmem_need(tb, tc, d, x_bytes, w_bytes):
    """Conservative VMEM footprint: double-buffered streams + epilogue temporaries."""
    streams = 2 * (tb * d * x_bytes       # x tile
                   + d * tc * w_bytes     # W^T tile (dominant stream)
                   + tc * 4               # bias
                   + 2 * tb * 4           # inv||x|| + labels
                   + tb * 128 * 4)        # output slab
    temps = 6 * tb * tc * 4 + 2 * d * tc * 4   # epilogue f32 temps + weight-norm temps
    return streams + temps + (2 << 20)


# Preference order: large tb first (cuts weight re-streaming), then large tc
# (amortizes the ~0.35 us/step grid overhead).  First candidate that fits wins.
_TILE_CANDIDATES = (
    (1024, 4096), (1024, 2048), (512, 4096), (1024, 1024), (512, 2048),
    (512, 1024), (256, 2048), (256, 1024), (512, 512), (256, 512),
    (128, 1024), (128, 512), (128, 256), (64, 512), (64, 256),
    (32, 256), (16, 128), (8, 128),
)


def _choose_tiles(b8, c128, d, x_bytes, w_bytes):
    budget = int(_vmem_capacity() * 0.7)
    for tb_c, tc_c in _TILE_CANDIDATES:
        tb, tc = min(tb_c, b8), min(tc_c, c128)
        if _kernel_vmem_need(tb, tc, d, x_bytes, w_bytes) <= budget:
            return tb, tc
    return min(8, b8), min(128, c128)


# --------------------------------------------------------------------------------------
# Wrapper
# --------------------------------------------------------------------------------------
def normalized_bce_loss(x, weight, bias, label, *, m=0.4, s=64.0,
                        block_b=None, block_c=None,
                        compute_dtype=jnp.bfloat16,
                        class_splits=None, weight_is_transposed=False):
    """Forward pass of Normalized_BCE_Loss.

    x:      (B, D) float.
    weight: (C, D) parameters, or (D, C) if weight_is_transposed=True.  For repeated
            calls store the parameter pre-transposed and pre-cast to `compute_dtype`
            so the wrapper never copies W.
    bias:   (1, C) or (C,) float.
    label:  (B,) integer class ids.
    Returns the scalar loss: per-row sum over classes, averaged over the batch.
    """
    B, D = x.shape
    if weight_is_transposed:
        d_w, C = weight.shape
    else:
        C, d_w = weight.shape
    assert d_w == D, (weight.shape, x.shape)
    assert bias.size == C

    cdt = jnp.dtype(compute_dtype)
    x_bytes = w_bytes = cdt.itemsize

    b8 = _round_up(B, 8)
    c128 = _round_up(C, 128)
    tb_auto = tc_auto = None
    if block_b is None or block_c is None:
        tb_auto, tc_auto = _choose_tiles(b8, c128, D, x_bytes, w_bytes)
    tb = tb_auto if block_b is None else min(_round_up(block_b, 8), b8)
    tc = tc_auto if block_c is None else min(_round_up(block_c, 128), c128)

    nc0 = -(-c128 // tc)
    if class_splits is None:
        class_splits = 2 if nc0 >= 2 else 1    # v7x: each TensorCore streams half of W
    c_pad = _round_up(c128, tc * class_splits)
    nc_per = c_pad // (tc * class_splits)
    b_pad = _round_up(b8, tb)
    nb = b_pad // tb

    # ---- operand prep (all conditional: no-op when already in the streamed layout) ----
    # x: norms in f32, streamed copy in compute dtype (half-size resident tile).
    xp32 = x.astype(jnp.float32)
    if b_pad != B:
        xp32 = jnp.pad(xp32, ((0, b_pad - B), (0, 0)))
    inv_x = jax.lax.rsqrt(
        jnp.maximum(jnp.sum(xp32 * xp32, axis=1, keepdims=True), _EPS2))      # (b_pad, 1)
    x_stream = xp32 if cdt == jnp.dtype(jnp.float32) else xp32.astype(cdt)

    # W: presented K-major (D, c_pad) in the compute dtype.
    wt = weight if weight_is_transposed else weight.T
    if wt.dtype != cdt:
        wt = wt.astype(cdt)
    if c_pad != C:
        wt = jnp.pad(wt, ((0, 0), (0, c_pad - C)))

    # Padded classes: bias padded with 3*s makes their clipped logit -s, which gives an
    # exactly-zero loss when exp(-s) underflows the f32 "1 +" (s >= 18); otherwise mask.
    mask_cols = (c_pad != C) and (float(s) < 18.0)
    bp = bias.reshape(1, C).astype(jnp.float32)
    if c_pad != C:
        bp = jnp.pad(bp, ((0, 0), (0, c_pad - C)), constant_values=3.0 * float(s))

    lp = label.astype(jnp.int32).reshape(B, 1)
    if b_pad != B:
        lp = jnp.pad(lp, ((0, b_pad - B), (0, 0)))

    need = _kernel_vmem_need(tb, tc, D, x_bytes, w_bytes)
    vmem_limit = int(min(_vmem_capacity(), max(int(need * 1.5), 32 << 20)))

    kernel = functools.partial(_nbce_kernel, m=float(m), s=float(s),
                               mask_cols=mask_cols, c_actual=C)

    def _col_index(g, b, c):          # weight / bias class-tile index
        return (0, g * nc_per + c)

    def _row_index(g, b, c):          # per-batch-tile operands (resident over C)
        return (b, 0)

    out = pl.pallas_call(
        kernel,
        out_shape=jax.ShapeDtypeStruct((class_splits, b_pad, 128), jnp.float32),
        grid=(class_splits, nb, nc_per),
        in_specs=[
            pl.BlockSpec((tb, D), _row_index),        # x          (resident over C)
            pl.BlockSpec((D, tc), _col_index),        # W^T stream (per class split)
            pl.BlockSpec((1, tc), _col_index),        # bias
            pl.BlockSpec((tb, 1), _row_index),        # inv ||x||
            pl.BlockSpec((tb, 1), _row_index),        # labels
        ],
        out_specs=pl.BlockSpec((None, tb, 128), lambda g, b, c: (g, b, 0)),
        compiler_params=pltpu.CompilerParams(
            dimension_semantics=("parallel", "parallel", "arbitrary"),
            vmem_limit_bytes=vmem_limit),
    )(x_stream, wt, bp, inv_x, lp)

    # out[g, i, :] holds lane-partial per-row sums from class-split g; the tiny final
    # reduction (splits x lanes x rows) and the batch mean happen here.  Padded rows
    # are dropped by slicing to :B.
    return jnp.sum(out[:, :B, :]) / jnp.float32(B)


# --------------------------------------------------------------------------------------
# Parameter init + pure-JAX reference (for self-checking)
# --------------------------------------------------------------------------------------
def make_params(in_features, out_features, key):
    # kaiming_normal_(a=1, mode='fan_in', nonlinearity='leaky_relu'):
    #   gain = sqrt(2 / (1 + a^2)) = 1.0  ->  std = 1 / sqrt(fan_in)
    std = 1.0 / math.sqrt(in_features)
    weight = jax.random.normal(key, (out_features, in_features), jnp.float32) * std
    bias = jnp.full((1, out_features), math.log(out_features * 10), jnp.float32)
    return weight, bias


def reference_loss(x, w, b, label, m=0.4, s=64.0):
    """Direct transcription of the PyTorch forward."""
    eps = 1e-5
    xn = x / jnp.maximum(jnp.linalg.norm(x, axis=1, keepdims=True), eps)
    wn = w / jnp.maximum(jnp.linalg.norm(w, axis=1, keepdims=True), eps)
    cos = xn @ wn.T
    p = s * (cos - m) - b
    n = s * cos - b
    p_loss = jnp.log(1 + jnp.exp(-jnp.clip(p, -s, s)))
    n_loss = jnp.log(1 + jnp.exp(jnp.clip(n, -s, s)))
    oh = jax.nn.one_hot(label, w.shape[0], dtype=bool)
    return jnp.where(oh, p_loss, n_loss).sum(axis=1).mean()


if __name__ == "__main__":
    # --- small shapes consistent with the module -------------------------------------
    B, in_features, out_features = 8, 32, 16
    key = jax.random.PRNGKey(0)
    k_x, k_w, k_l = jax.random.split(key, 3)

    x = jax.random.normal(k_x, (B, in_features), jnp.float32)
    label = jax.random.randint(k_l, (B,), 0, out_features, jnp.int32)
    weight, bias = make_params(in_features, out_features, k_w)
    expected = reference_loss(x, weight, bias, label, 0.4, 64.0)

    # f32 MXU operands: tight check against the reference.
    loss_f32 = normalized_bce_loss(x, weight, bias, label, compute_dtype=jnp.float32)
    jax.block_until_ready(loss_f32)
    assert jnp.allclose(loss_f32, expected, rtol=1e-4, atol=1e-3), (loss_f32, expected)

    # Default bf16 MXU/stream path (f32 epilogue): loose tolerance (s=64 amplifies).
    loss_bf16 = normalized_bce_loss(x, weight, bias, label)
    jax.block_until_ready(loss_bf16)
    assert jnp.abs(loss_bf16 - expected) < 0.1 * jnp.abs(expected) + 1.0, (loss_bf16, expected)

    # Recommended param storage: pre-transposed + pre-cast weight -> zero wrapper copies.
    wt_pre = weight.T.astype(jnp.bfloat16)
    loss_pre = normalized_bce_loss(x, wt_pre, bias, label, weight_is_transposed=True)
    jax.block_until_ready(loss_pre)
    assert jnp.allclose(loss_pre, loss_bf16), (loss_pre, loss_bf16)

    # --- multi-tile path: several B tiles, class split, padded classes (s=64 trick) ---
    B2, D2, C2 = 20, 64, 300
    k_x2, k_w2, k_l2 = jax.random.split(jax.random.PRNGKey(1), 3)
    x2 = jax.random.normal(k_x2, (B2, D2), jnp.float32)
    label2 = jax.random.randint(k_l2, (B2,), 0, C2, jnp.int32)
    weight2, bias2 = make_params(D2, C2, k_w2)

    expected2 = reference_loss(x2, weight2, bias2, label2)
    loss2 = normalized_bce_loss(x2, weight2, bias2, label2, block_b=8, block_c=128,
                                compute_dtype=jnp.float32)
    jax.block_until_ready(loss2)
    assert jnp.allclose(loss2, expected2, rtol=1e-4, atol=1e-3), (loss2, expected2)

    # --- small s exercises the explicit padded-class masking path ----------------------
    expected3 = reference_loss(x2, weight2, bias2, label2, m=0.2, s=8.0)
    loss3 = normalized_bce_loss(x2, weight2, bias2, label2, m=0.2, s=8.0,
                                block_b=8, block_c=128, compute_dtype=jnp.float32)
    jax.block_until_ready(loss3)
    assert jnp.allclose(loss3, expected3, rtol=1e-4, atol=1e-3), (loss3, expected3)

    print("KERNEL_OK")
</pallas_src>

<mosaic_0001>
module attributes {stable_mosaic.version = 11 : i64} {
  func.func @_nbce_kernel(%arg0: i32, %arg1: i32, %arg2: i32, %arg3: memref<8x32xf32, #tpu.memory_space<vmem>>, %arg4: memref<32x128xf32, #tpu.memory_space<vmem>>, %arg5: memref<1x128xf32, #tpu.memory_space<vmem>>, %arg6: memref<8x1xf32, #tpu.memory_space<vmem>>, %arg7: memref<8x1xi32, #tpu.memory_space<vmem>>, %arg8: memref<1x8x128xf32, #tpu.memory_space<vmem>>) attributes {dimension_semantics = [#tpu.dimension_semantics<parallel>, #tpu.dimension_semantics<parallel>, #tpu.dimension_semantics<arbitrary>], iteration_bounds = array<i64: 1, 1, 1>, scalar_prefetch = 0 : i64, scratch_operands = 0 : i64, tpu.core_type = #tpu.core_type<tc>, window_params = [{transform_indices = @transform_0, window_bounds = array<i64: 8, 32>}, {transform_indices = @transform_1, window_bounds = array<i64: 32, 128>}, {transform_indices = @transform_2, window_bounds = array<i64: 1, 128>}, {transform_indices = @transform_3, window_bounds = array<i64: 8, 1>}, {transform_indices = @transform_4, window_bounds = array<i64: 8, 1>}, {transform_indices = @transform_5, window_bounds = array<i64: 1, 8, 128>}]} {
    %c0_i32 = arith.constant 0 : i32
    %0 = arith.cmpi eq, %arg2, %c0_i32 : i32
    %1 = arith.extui %0 : i1 to i32
    %c0_i32_0 = arith.constant 0 : i32
    %2 = arith.cmpi ne, %1, %c0_i32_0 : i32
    scf.if %2 {
      %cst_23 = arith.constant 0.000000e+00 : f32
      %48 = vector.broadcast %cst_23 : f32 to vector<8x128xf32>
      %c0_24 = arith.constant 0 : index
      %c0_25 = arith.constant 0 : index
      %c0_26 = arith.constant 0 : index
      %49 = vector.load %arg8[%c0_24, %c0_25, %c0_26] : memref<1x8x128xf32, #tpu.memory_space<vmem>>, vector<1x8x128xf32>
      %50 = vector.shape_cast %49 : vector<1x8x128xf32> to vector<8x128xf32>
      %51 = vector.shape_cast %48 : vector<8x128xf32> to vector<1x8x128xf32>
      tpu.vector_store %arg8[%c0_24, %c0_25, %c0_26], %51 {strides = array<i32>} : memref<1x8x128xf32, #tpu.memory_space<vmem>>, vector<1x8x128xf32>,
    } else {
    }
    %c0 = arith.constant 0 : index
    %c0_1 = arith.constant 0 : index
    %3 = vector.load %arg4[%c0, %c0_1] : memref<32x128xf32, #tpu.memory_space<vmem>>, vector<32x128xf32>
    %4 = arith.mulf %3, %3 : vector<32x128xf32>
    %cst = arith.constant dense<0.000000e+00> : vector<128xf32>
    %5 = vector.multi_reduction <add>, %4, %cst [0] : vector<32x128xf32> to vector<128xf32>
    %6 = vector.shape_cast %5 : vector<128xf32> to vector<1x128xf32>
    %cst_2 = arith.constant 1.000000e-10 : f32
    %7 = vector.broadcast %cst_2 : f32 to vector<1x128xf32>
    %8 = arith.maximumf %6, %7 : vector<1x128xf32>
    %9 = math.rsqrt %8 : vector<1x128xf32>
    %c0_3 = arith.constant 0 : index
    %c0_4 = arith.constant 0 : index
    %10 = vector.load %arg3[%c0_3, %c0_4] : memref<8x32xf32, #tpu.memory_space<vmem>>, vector<8x32xf32>
    %cst_5 = arith.constant dense<0.000000e+00> : vector<8x128xf32>
    %11 = tpu.matmul %10, %3, %cst_5 {dimension_numbers = #tpu.dot_dimension_numbers<[1], [0], [0], [1], [0, 0, 1, 1], [], []>} : vector<8x32xf32>, vector<32x128xf32>, vector<8x128xf32> -> vector<8x128xf32>
    %c0_6 = arith.constant 0 : index
    %c0_7 = arith.constant 0 : index
    %12 = vector.load %arg6[%c0_6, %c0_7] : memref<8x1xf32, #tpu.memory_space<vmem>>, vector<8x1xf32>
    %13 = vector.broadcast %12 : vector<8x1xf32> to vector<8x128xf32>
    %14 = arith.mulf %11, %13 : vector<8x128xf32>
    %15 = vector.broadcast %9 : vector<1x128xf32> to vector<8x128xf32>
    %16 = arith.mulf %14, %15 : vector<8x128xf32>
    %c0_8 = arith.constant 0 : index
    %c0_9 = arith.constant 0 : index
    %17 = vector.load %arg5[%c0_8, %c0_9] : memref<1x128xf32, #tpu.memory_space<vmem>>, vector<1x128xf32>
    %c0_10 = arith.constant 0 : index
    %c0_11 = arith.constant 0 : index
    %18 = vector.load %arg7[%c0_10, %c0_11] : memref<8x1xi32, #tpu.memory_space<vmem>>, vector<8x1xi32>
    %c1_i32 = arith.constant 1 : i32
    %19 = arith.muli %arg0, %c1_i32 : i32
    %20 = arith.addi %19, %arg2 : i32
    %c128_i32 = arith.constant 128 : i32
    %21 = arith.muli %20, %c128_i32 : i32
    %22 = tpu.iota {dimensions = array<i32: 1>} : vector<8x128xi32>
    %23 = vector.broadcast %21 : i32 to vector<8x128xi32>
    %24 = arith.addi %23, %22 : vector<8x128xi32>
    %25 = vector.broadcast %18 : vector<8x1xi32> to vector<8x128xi32>
    %26 = arith.cmpi eq, %24, %25 : vector<8x128xi32>
    %cst_12 = arith.constant 6.400000e+01 : f32
    %27 = vector.broadcast %cst_12 : f32 to vector<8x128xf32>
    %28 = arith.mulf %27, %16 : vector<8x128xf32>
    %29 = vector.broadcast %17 : vector<1x128xf32> to vector<8x128xf32>
    %30 = arith.subf %28, %29 : vector<8x128xf32>
    %cst_13 = arith.constant 2.560000e+01 : f32
    %31 = vector.broadcast %cst_13 : f32 to vector<8x128xf32>
    %32 = arith.subf %31, %30 : vector<8x128xf32>
    %33 = arith.select %26, %32, %30 : vector<8x128xi1>, vector<8x128xf32>
    %cst_14 = arith.constant -6.400000e+01 : f32
    %cst_15 = arith.constant 6.400000e+01 : f32
    %34 = vector.broadcast %cst_14 : f32 to vector<8x128xf32>
    %35 = arith.maximumf %34, %33 : vector<8x128xf32>
    %36 = vector.broadcast %cst_15 : f32 to vector<8x128xf32>
    %37 = arith.minimumf %36, %35 : vector<8x128xf32>
    %38 = math.exp %37 : vector<8x128xf32>
    %cst_16 = arith.constant 1.000000e+00 : f32
    %39 = vector.broadcast %cst_16 : f32 to vector<8x128xf32>
    %40 = arith.addf %39, %38 : vector<8x128xf32>
    %41 = math.log %40 : vector<8x128xf32>
    %c0_17 = arith.constant 0 : index
    %c0_18 = arith.constant 0 : index
    %c0_19 = arith.constant 0 : index
    %42 = vector.load %arg8[%c0_17, %c0_18, %c0_19] : memref<1x8x128xf32, #tpu.memory_space<vmem>>, vector<1x8x128xf32>
    %43 = vector.shape_cast %42 : vector<1x8x128xf32> to vector<8x128xf32>
    %44 = arith.addf %43, %41 : vector<8x128xf32>
    %c0_20 = arith.constant 0 : index
    %c0_21 = arith.constant 0 : index
    %c0_22 = arith.constant 0 : index
    %45 = vector.load %arg8[%c0_20, %c0_21, %c0_22] : memref<1x8x128xf32, #tpu.memory_space<vmem>>, vector<1x8x128xf32>
    %46 = vector.shape_cast %45 : vector<1x8x128xf32> to vector<8x128xf32>
    %47 = vector.shape_cast %44 : vector<8x128xf32> to vector<1x8x128xf32>
    tpu.vector_store %arg8[%c0_20, %c0_21, %c0_22], %47 {strides = array<i32>} : memref<1x8x128xf32, #tpu.memory_space<vmem>>, vector<1x8x128xf32>,
    return
  }
  func.func @transform_0(%arg0: i32, %arg1: i32, %arg2: i32) -> (i32, i32) {
    %c0_i32 = arith.constant 0 : i32
    %c0_i32_0 = arith.constant 0 : i32
    return %arg1, %c0_i32 : i32, i32
  }
  func.func @transform_1(%arg0: i32, %arg1: i32, %arg2: i32) -> (i32, i32) {
    %c1_i32 = arith.constant 1 : i32
    %0 = arith.muli %arg0, %c1_i32 : i32
    %1 = arith.addi %0, %arg2 : i32
    %c0_i32 = arith.constant 0 : i32
    %c0_i32_0 = arith.constant 0 : i32
    return %c0_i32, %1 : i32, i32
  }
  func.func @transform_2(%arg0: i32, %arg1: i32, %arg2: i32) -> (i32, i32) {
    %c1_i32 = arith.constant 1 : i32
    %0 = arith.muli %arg0, %c1_i32 : i32
    %1 = arith.addi %0, %arg2 : i32
    %c0_i32 = arith.constant 0 : i32
    %c0_i32_0 = arith.constant 0 : i32
    return %c0_i32, %1 : i32, i32
  }
  func.func @transform_3(%arg0: i32, %arg1: i32, %arg2: i32) -> (i32, i32) {
    %c0_i32 = arith.constant 0 : i32
    %c0_i32_0 = arith.constant 0 : i32
    return %arg1, %c0_i32 : i32, i32
  }
  func.func @transform_4(%arg0: i32, %arg1: i32, %arg2: i32) -> (i32, i32) {
    %c0_i32 = arith.constant 0 : i32
    %c0_i32_0 = arith.constant 0 : i32
    return %arg1, %c0_i32 : i32, i32
  }
  func.func @transform_5(%arg0: i32, %arg1: i32, %arg2: i32) -> (i32, i32, i32) {
    %c0_i32 = arith.constant 0 : i32
    %c0_i32_0 = arith.constant 0 : i32
    return %arg0, %arg1, %c0_i32 : i32, i32, i32
  }
}

</mosaic_0001>

<llo_original>
// kernel: tpu_custom_call.1
$region0: #{tpu_custom_call.1}
  #allocation0 [shape = 'u32[]', space=smem, size = 0x4, offset = 0x4, fixed_abs, tag = 'smem constant byte address 0x4 - core index']
  #allocation1 [shape = 'u32[144,128]{1,0:T(1,128)}', space=vmem, size = 0x12000, scoped, tag = 'internal scratch']
  %s0 = inlined_call_operand.vmem [shape: f32[8,32], index: 0, kind: input, shape index: {}]
  %s1 = inlined_call_operand.hbm [shape: f32[32,128], index: 1, kind: input, shape index: {}]
  %s2 = inlined_call_operand.vmem [shape: f32[1,128], index: 2, kind: input, shape index: {}]
  %s3 = inlined_call_operand.vmem [shape: f32[8,1], index: 3, kind: input, shape index: {}]
  %s4 = inlined_call_operand.vmem [shape: s32[8,1], index: 4, kind: input, shape index: {}]
  %s5 = inlined_call_operand.hbm [shape: f32[1,8,128], index: 5, kind: output, shape index: {}]
  %s6 = sld [smem:[#allocation0]]
  $region38: #{tpu_custom_call.1} parent=0
    _
  %s8 = ssub.s32 1, %s6
  %s9 = scalar_select 0, %s8, %s6
  $region1: #{tpu_custom_call.1} parent=0
    #allocation2 [shape = 'u8[16384]{0}', space=vmem, size = 0x4000, scoped, tag = 'input window, operand 1, single buffered']
    #allocation3 [shape = 's32[1]{0}', space=sflag, size = 0x4, scoped, tag = 'scoped memory for tpu_custom_call.1']
    #allocation4 [shape = 's32[1]{0}', space=sflag, size = 0x4, scoped, tag = 'scoped memory for tpu_custom_call.1']
    #allocation5 [shape = 'u8[4096]{0}', space=vmem, size = 0x1000, scoped, tag = 'output window, operand 0, single buffered']
    %10 = vsyncpa [#allocation3], 0
    %11 = vsyncpa [#allocation4], 0
    // Predicated region
    $region2: #{tpu_custom_call.1} parent=1 // pred_check
      _
    $region3: #{tpu_custom_call.1} parent=1 // pred_check_branch
      %13 = sbr.rel (0) target = $region5
    $region4: #{tpu_custom_call.1} parent=1 // pred_region
      _
    $region5: #{tpu_custom_call.1} parent=1 // pred_fallthru
      _
    // Predicated region
    $region6: #{tpu_custom_call.1} parent=1 // pred_check
      _
    $region7: #{tpu_custom_call.1} parent=1 // pred_check_branch
      %15 = sbr.rel (0) target = $region9
    $region8: #{tpu_custom_call.1} parent=1 // pred_region
      %s16 = sadd.s32 0, 0
      %s18 = ssub.s32 512, 512
      %19 = vsyncadd [#allocation3], %s18
      %s20 = smul.addr %s16, 128
      %s21 = scalar_lea.hbm %s1, %s20
      %s22 = sshll.u32 [#allocation2], 4
      %s23 = int_to_ptr.vmem [resolvable:$true] %s22
      %28 = dma.hbm_to_vmem [thread:$0]  %s21, 512, %s23, [#allocation3], 128, 128, 8
    $region9: #{tpu_custom_call.1} parent=1 // pred_fallthru
      _
    // Predicated region
    $region10: #{tpu_custom_call.1} parent=1 // pred_check
      _
    $region11: #{tpu_custom_call.1} parent=1 // pred_check_branch
      %30 = sbr.rel (0) target = $region13
    $region12: #{tpu_custom_call.1} parent=1 // pred_region
      %s31 = sadd.s32 0, 0
      %p32 = scmp.lt.s32.totalorder %s31, 0
      %s33 = scalar_select %p32, %s31, 0
      %s34 = scalar_lea.vmem %s2, %s33
      %s35 = sadd.s32 0, 0
    $region13: #{tpu_custom_call.1} parent=1 // pred_fallthru
      _
    // Predicated region
    $region14: #{tpu_custom_call.1} parent=1 // pred_check
      _
    $region15: #{tpu_custom_call.1} parent=1 // pred_check_branch
      %37 = sbr.rel (0) target = $region17
    $region16: #{tpu_custom_call.1} parent=1 // pred_region
      _
    $region17: #{tpu_custom_call.1} parent=1 // pred_fallthru
      _
    // Predicated region
    $region18: #{tpu_custom_call.1} parent=1 // pred_check
      _
    $region19: #{tpu_custom_call.1} parent=1 // pred_check_branch
      %39 = sbr.rel (0) target = $region21
    $region20: #{tpu_custom_call.1} parent=1 // pred_region
      _
    $region21: #{tpu_custom_call.1} parent=1 // pred_fallthru
      _
    // Predicated region
    $region22: #{tpu_custom_call.1} parent=1 // pred_check
      _
    $region23: #{tpu_custom_call.1} parent=1 // pred_check_branch
      %41 = sbr.rel (0) target = $region25
    $region24: #{tpu_custom_call.1} parent=1 // pred_region
      %42 = dma.done [#allocation3], 512
    $region25: #{tpu_custom_call.1} parent=1 // pred_fallthru
      _
    %s43 = sadd.s32 0, 0
    %p44 = scmp.lt.s32.totalorder %s43, 0
    %s45 = scalar_select %p44, %s43, 0
    %s46 = scalar_lea.vmem %s2, %s45
    %s47 = sadd.s32 0, 0
    %s48 = sadd.s32 0, 0
    %p49 = scmp.lt.s32.totalorder %s48, 0
    %s50 = scalar_select %p49, %s48, 0
    %s51 = scalar_lea.vmem %s2, %s50
    %s52 = sadd.s32 0, 0
    %p53 = scmp.eq.s32.totalorder 0, 0
    // Predicated region
    $region26: #{tpu_custom_call.1} parent=1 // pred_check
      %p54 = pneg %p53
    $region27: #{tpu_custom_call.1} parent=1 // pred_check_branch
      %56 = sbr.rel (%p54) target = $region29
    $region28: #{tpu_custom_call.1} parent=1 // pred_region
      %57 = vst [vmem:[#allocation5] sm:$0xff] 0.0
    $region29: #{tpu_custom_call.1} parent=1 // pred_fallthru
      _
    %v58 = vld [vmem:[#allocation2] sm:$0xff]
    %v59 = vld [vmem:[#allocation2 + $0x8] sm:$0xff]
    %v60 = vld [vmem:[#allocation2 + $0x10] sm:$0xff]
    %v61 = vld [vmem:[#allocation2 + $0x18] sm:$0xff]
    %v62 = vmul.f32 %v58, %v58
    %v63 = vmul.f32 %v59, %v59
    %v64 = vmul.f32 %v60, %v60
    %v65 = vmul.f32 %v61, %v61
    %v66 = vadd.f32 %v62, %v63
    %v67 = vadd.f32 %v66, %v64
    %v68 = vadd.f32 %v67, %v65
    %v69 = vrot.slane %v68, 4
    %v70 = vadd.f32 %v68, %v69
    %v71 = vrot.slane %v70, 2
    %v72 = vadd.f32 %v70, %v71
    %v73 = vrot.slane %v72, 1
    %v74 = vadd.f32 %v72, %v73
    %v75 = vmax.f32 %v74, 1e-10
    %v76 = vrsqrt.pop %v75
    %v77 = vld [vmem:[%s0] sm:$0xff]
    %vm78 = vcmask 261120
    %v80 = vsel %vm78, %v77, 0
    %82 = vmatprep.subr.mxu0 0.0
    %83 = vmatpush1.msra.mxu0 0.0
    %84 = vmatprep.subr.mxu0 0.0
    %85 = vmatpush1.msra.mxu0 0.0
    %86 = vmatprep.subr.mxu0 0.0
    %87 = vmatpush1.msra.mxu0 0.0
    %88 = vmatprep.subr.mxu0 0.0
    %89 = vmatpush1.msra.mxu0 0.0
    %90 = vmatprep.subr.mxu0 0.0
    %91 = vmatpush1.msra.mxu0 0.0
    %92 = vmatprep.subr.mxu0 0.0
    %93 = vmatpush1.msra.mxu0 0.0
    %94 = vmatprep.subr.mxu0 0.0
    %95 = vmatpush1.msra.mxu0 0.0
    %96 = vmatprep.subr.mxu0 0.0
    %97 = vmatpush1.msra.mxu0 0.0
    %98 = vmatprep.subr.mxu0 0.0
    %99 = vmatpush1.msra.mxu0 0.0
    %100 = vmatprep.subr.mxu0 0.0
    %101 = vmatpush1.msra.mxu0 0.0
    %102 = vmatprep.subr.mxu0 0.0
    %103 = vmatpush1.msra.mxu0 0.0
    %104 = vmatprep.subr.mxu0 0.0
    %105 = vmatpush1.msra.mxu0 0.0
    %106 = vmatprep.subr.mxu0 0.0
    %107 = vmatpush1.msra.mxu0 %v61
    %108 = vmatprep.subr.mxu0 0.0
    %109 = vmatpush1.msra.mxu0 %v60
    %110 = vmatprep.subr.mxu0 0.0
    %111 = vmatpush1.msra.mxu0 %v59
    %112 = vmatprep.subr.mxu0 0.0
    %113 = vmatpush1.msra.mxu0 %v58
    %114 = vmatprep.subr.mxu0 0.0
    %115 = vmatpush2.msra.mxu0 0.0
    %116 = vmatprep.subr.mxu0 0.0
    %117 = vmatpush2.msra.mxu0 0.0
    %118 = vmatprep.subr.mxu0 0.0
    %119 = vmatpush2.msra.mxu0 0.0
    %120 = vmatprep.subr.mxu0 0.0
    %121 = vmatpush2.msra.mxu0 0.0
    %122 = vmatprep.subr.mxu0 0.0
    %123 = vmatpush2.msra.mxu0 0.0
    %124 = vmatprep.subr.mxu0 0.0
    %125 = vmatpush2.msra.mxu0 0.0
    %126 = vmatprep.subr.mxu0 0.0
    %127 = vmatpush2.msra.mxu0 0.0
    %128 = vmatprep.subr.mxu0 0.0
    %129 = vmatpush2.msra.mxu0 0.0
    %130 = vmatprep.subr.mxu0 0.0
    %131 = vmatpush2.msra.mxu0 0.0
    %132 = vmatprep.subr.mxu0 0.0
    %133 = vmatpush2.msra.mxu0 0.0
    %134 = vmatprep.subr.mxu0 0.0
    %135 = vmatpush2.msra.mxu0 0.0
    %136 = vmatprep.subr.mxu0 0.0
    %137 = vmatpush2.msra.mxu0 0.0
    %138 = vmatprep.subr.mxu0 0.0
    %139 = vmatpush2.msra.mxu0 0.0
    %140 = vmatprep.subr.mxu0 0.0
    %141 = vmatpush2.msra.mxu0 0.0
    %142 = vmatprep.subr.mxu0 0.0
    %143 = vmatpush2.msra.mxu0 0.0
    %144 = vmatprep.subr.mxu0 0.0
    %145 = vmatpush2.msra.mxu0 0.0
    %146 = vmatprep.mubr.f32.mxu0 0.0
    %147 = vmatmul.mubr.f32.gmra.mxu0 %v80
    %v148 = vpop.f32.mrf.mxu0
    %v149 = vadd.f32 0.0, %v148
    %v150 = vpop.f32.mrf.mxu0
    %151 = vdwg.mxu0
    %v152 = vld [vmem:[%s3] sm:$0xff]
    %154 = vset.pattern.permute.xlu0 0
    %155 = vperm.xlu0 %154, %v152
    %v156 = vpop.permute.xlu0 %155
    %v158 = vmul.f32 %v149, %v156
    %v159 = vmul.f32 %v158, %v76
    %v160 = vld [vmem:[%s51] sm:$0x1]
    %v161 = vld [vmem:[%s4] sm:$0xff]
    %s162 = sadd.s32 0, 0
    %s163 = smul.u32 %s162, 128
    %v164 = vlaneseq
    %v165 = vand.u32 %v164, 127
    %v166 = vstv %s163
    %v167 = vadd.s32 %v166, %v165
    %168 = vset.pattern.permute.xlu0 0
    %169 = vperm.xlu0 %168, %v161
    %v170 = vpop.permute.xlu0 %169
    %vm171 = vcmp.eq.s32.totalorder %v167, %v170
    %v172 = vmul.f32 %v159, 64.0
    %v174 = vlaneseq
    %v175 = vshrl.u32 %v174, 7
    %v176 = vsub.s32 0, %v175
    %v177 = vrot.slane %v160, %v176
    %v179 = vsub.f32 %v172, %v177
    %v180 = vsub.f32 25.6, %v179
    %v181 = vsel %vm171, %v180, %v179
    %v182 = vmax.f32 %v181, -64.0
    %v183 = vmin.f32 %v182, 64.0
    %v184 = vmul.f32 %v183, 1.442695
    %v185 = vpow.pop %v184
    %v186 = vadd.f32 %v185, 1.0
    %v187 = vlog2.pop %v186
    %v188 = vmul.f32 %v187, 0.6931472
    %v189 = vld [vmem:[#allocation5] sm:$0xff]
    %v190 = vadd.f32 %v189, %v188
    %191 = vst [vmem:[#allocation5] sm:$0xff] %v190
    // Predicated region
    $region30: #{tpu_custom_call.1} parent=1 // pred_check
      _
    $region31: #{tpu_custom_call.1} parent=1 // pred_check_branch
      %193 = sbr.rel (0) target = $region33
    $region32: #{tpu_custom_call.1} parent=1 // pred_region
      %s195 = ssub.s32 128, 128
      %196 = vsyncadd [#allocation4], %s195
      %s198 = sshll.u32 [#allocation5], 4
      %s199 = int_to_ptr.vmem [resolvable:$true] %s198
      %201 = dma.vmem_to_hbm [thread:$0]  %s199, 128, %s5, [#allocation4]
    $region33: #{tpu_custom_call.1} parent=1 // pred_fallthru
      _
    // Predicated region
    $region34: #{tpu_custom_call.1} parent=1 // pred_check
      _
    $region35: #{tpu_custom_call.1} parent=1 // pred_check_branch
      %203 = sbr.rel (0) target = $region37
    $region36: #{tpu_custom_call.1} parent=1 // pred_region
      %204 = dma.done [#allocation4], 128
    $region37: #{tpu_custom_call.1} parent=1 // pred_fallthru
      _
    %205 = vsyncpa [#allocation3], 1
    %206 = vsyncpa [#allocation4], 1

</llo_original>
